<compile_context>
chip_gen: v7x
topology: tpu7x:2x2x1
jax: 0.10.0
libtpu: 0.0.40
codegen_flags: <defaults>
</compile_context>

<pallas_src>
import functools

import jax
import jax.numpy as jnp
from jax.experimental import pallas as pl
from jax.experimental.pallas import tpu as pltpu


def _round_up(x, m):
    return (x + m - 1) // m * m


def gmm_forward_kernel(x_ref,
                       w1_ref, b1_ref,
                       w2_ref, b2_ref,
                       w3_ref, b3_ref,
                       wh_ref, bh_ref,
                       out_ref,
                       *, sigma_start):
    """One batch tile: 3-layer tanh MLP + fused 3-head matmul + sigma clamp.

    Matmul operands are whatever dtype the wrapper stored (bf16 by default),
    accumulation and all elementwise work are f32.
    """
    od = w1_ref.dtype
    x = x_ref[...]

    h = jnp.tanh(jnp.dot(x, w1_ref[...],
                         preferred_element_type=jnp.float32) + b1_ref[...])
    h = jnp.tanh(jnp.dot(h.astype(od), w2_ref[...],
                         preferred_element_type=jnp.float32) + b2_ref[...])
    h = jnp.dot(h.astype(od), w3_ref[...],
                preferred_element_type=jnp.float32) + b3_ref[...]

    # Fused heads: [alphas | means | log_sigmas | lane-pad] in one lane-dense slab.
    # The sigma bias already has -5 folded in, so clamp_min(z,-5)-5 == max(z',-10).
    z = jnp.dot(h.astype(od), wh_ref[...],
                preferred_element_type=jnp.float32) + bh_ref[...]

    lane = jax.lax.broadcasted_iota(jnp.int32, (1, z.shape[1]), 1)
    out_ref[...] = jnp.where(lane >= sigma_start, jnp.maximum(z, -10.0), z)


def gmm_forward(x, params, *, mixture_size, targets, block_batch=512,
                operand_dtype=jnp.bfloat16, return_slab=False):
    """Pallas implementation of GaussianMixtureNetwork.forward.

    x: [N, input_dim] float32
    returns: (alphas [N, M], means [N, T, M], log_sigmas [N, T, M])
             or, if return_slab, the raw (N_padded, OWP) f32 slab plus metadata.
    """
    N, input_dim = x.shape
    (w1, b1, w2, b2, w3, b3, wa, ba, ws, bs, wm, bm) = params
    hidden_dim = w1.shape[1]

    M = mixture_size
    TM = targets * mixture_size
    out_w = M + 2 * TM                     # alphas | means | log_sigmas

    HP = _round_up(hidden_dim, 128)        # lane-pad hidden width
    OWP = _round_up(out_w, 128)            # lane-pad fused head width

    # ---- one-time weight packing / lane padding (zero pad keeps semantics) ----
    wh = jnp.concatenate([wa, wm, ws], axis=1)          # [hidden, M + TM + TM]
    bh = jnp.concatenate([ba, bm, bs - 5.0], axis=1)    # fold the "-5" into bs

    def pad2(a, rows, cols, dtype):
        a = jnp.pad(a, ((0, rows - a.shape[0]), (0, cols - a.shape[1])))
        return a.astype(dtype)

    od = operand_dtype
    w1p, b1p = pad2(w1, input_dim, HP, od), pad2(b1, 1, HP, jnp.float32)
    w2p, b2p = pad2(w2, HP, HP, od),        pad2(b2, 1, HP, jnp.float32)
    w3p, b3p = pad2(w3, HP, HP, od),        pad2(b3, 1, HP, jnp.float32)
    whp, bhp = pad2(wh, HP, OWP, od),       pad2(bh, 1, OWP, jnp.float32)

    # ---- adaptive batch tiling ----
    # TB is a multiple of 8 (sublane rule), never larger than needed for N,
    # and halved once if that buys a >=2-step grid (so v7x can use both TCs).
    TB = min(block_batch, _round_up(max(N, 1), 8))
    NP = _round_up(max(N, 1), TB)
    if NP // TB < 2 and TB > 8:
        TB = max(8, _round_up(TB // 2, 8))
        NP = _round_up(max(N, 1), TB)

    xp = jnp.pad(x, ((0, NP - N), (0, 0))).astype(od)

    grid = (NP // TB,)

    def resident(shape):
        # constant index map -> operand stays VMEM-resident across the grid
        return pl.BlockSpec(shape, lambda i: (0, 0))

    in_specs = [
        pl.BlockSpec((TB, input_dim), lambda i: (i, 0)),   # x: tiled over batch
        resident(w1p.shape), resident(b1p.shape),
        resident(w2p.shape), resident(b2p.shape),
        resident(w3p.shape), resident(b3p.shape),
        resident(whp.shape), resident(bhp.shape),
    ]
    out_spec = pl.BlockSpec((TB, OWP), lambda i: (i, 0))

    kernel = functools.partial(gmm_forward_kernel, sigma_start=M + TM)

    slab = pl.pallas_call(
        kernel,
        grid=grid,
        in_specs=in_specs,
        out_specs=out_spec,
        out_shape=jax.ShapeDtypeStruct((NP, OWP), jnp.float32),
        compiler_params=pltpu.CompilerParams(
            dimension_semantics=("parallel",)),
    )(xp, w1p, b1p, w2p, b2p, w3p, b3p, whp, bhp)

    if return_slab:
        # Downstream consumers can read lane ranges [0,M), [M,M+TM), [M+TM,M+2TM)
        # directly and skip the extra HBM pass below.
        return slab, (N, M, TM)

    # ---- split the lane-dense slab back into the three torch outputs ----
    alphas = slab[:N, :M]
    means = slab[:N, M:M + TM].reshape(N, targets, mixture_size)
    log_sigmas = slab[:N, M + TM:M + 2 * TM].reshape(N, targets, mixture_size)
    return alphas, means, log_sigmas


def init_params(key, input_dim, hidden_dim, mixture_size, targets):
    """Deterministic synthetic parameter init (PyTorch-like uniform)."""
    def linear(key, fan_in, fan_out):
        kw, kb = jax.random.split(key)
        bound = 1.0 / jnp.sqrt(fan_in)
        # store weight as [in, out] so the kernel does x @ W
        w = jax.random.uniform(kw, (fan_in, fan_out), jnp.float32,
                               -bound, bound)
        b = jax.random.uniform(kb, (1, fan_out), jnp.float32, -bound, bound)
        return w, b

    keys = jax.random.split(key, 6)
    w1, b1 = linear(keys[0], input_dim, hidden_dim)
    w2, b2 = linear(keys[1], hidden_dim, hidden_dim)
    w3, b3 = linear(keys[2], hidden_dim, hidden_dim)
    wa, ba = linear(keys[3], hidden_dim, mixture_size)
    ws, bs = linear(keys[4], hidden_dim, mixture_size * targets)
    wm, bm = linear(keys[5], hidden_dim, mixture_size * targets)
    return (w1, b1, w2, b2, w3, b3, wa, ba, ws, bs, wm, bm)


def gmm_forward_ref(x, params, *, mixture_size, targets,
                    operand_dtype=jnp.float32):
    """Pure-JAX reference matching the PyTorch forward semantics.

    operand_dtype lets us mirror the kernel's bf16-operand / f32-accumulation
    policy for a tight numerical comparison.
    """
    (w1, b1, w2, b2, w3, b3, wa, ba, ws, bs, wm, bm) = params
    od = operand_dtype

    def mm(a, w):
        return jnp.dot(a.astype(od), w.astype(od),
                       preferred_element_type=jnp.float32)

    h = jnp.tanh(mm(x, w1) + b1)
    h = jnp.tanh(mm(h, w2) + b2)
    h = mm(h, w3) + b3
    alphas = (mm(h, wa) + ba).reshape(-1, mixture_size)
    log_sigmas = (mm(h, ws) + bs).reshape(-1, targets, mixture_size)
    means = (mm(h, wm) + bm).reshape(-1, targets, mixture_size)
    return alphas, means, jnp.maximum(log_sigmas, -5.0) - 5.0


def _check(N, INPUT_DIM, HIDDEN, MIX, TARGETS, seed=0):
    key = jax.random.PRNGKey(seed)
    kx, kp = jax.random.split(key)
    x = jax.random.normal(kx, (N, INPUT_DIM), dtype=jnp.float32)
    params = init_params(kp, INPUT_DIM, HIDDEN, MIX, TARGETS)

    alphas, means, log_sigmas = gmm_forward(
        x, params, mixture_size=MIX, targets=TARGETS)
    jax.block_until_ready((alphas, means, log_sigmas))

    assert alphas.shape == (N, MIX)
    assert means.shape == (N, TARGETS, MIX)
    assert log_sigmas.shape == (N, TARGETS, MIX)

    # Tight check against a reference using the same bf16-operand / f32-acc policy.
    a_bf, m_bf, ls_bf = gmm_forward_ref(
        x, params, mixture_size=MIX, targets=TARGETS,
        operand_dtype=jnp.bfloat16)
    assert jnp.allclose(alphas, a_bf, atol=1e-4, rtol=1e-4)
    assert jnp.allclose(means, m_bf, atol=1e-4, rtol=1e-4)
    assert jnp.allclose(log_sigmas, ls_bf, atol=1e-4, rtol=1e-4)

    # Looser sanity check against the full-f32 torch-semantics reference
    # (bf16 operand storage is the only approximation).
    a_ref, m_ref, ls_ref = gmm_forward_ref(
        x, params, mixture_size=MIX, targets=TARGETS)
    assert jnp.allclose(alphas, a_ref, atol=5e-2, rtol=5e-2)
    assert jnp.allclose(means, m_ref, atol=5e-2, rtol=5e-2)
    assert jnp.allclose(log_sigmas, ls_ref, atol=5e-2, rtol=5e-2)


if __name__ == "__main__":
    # small shapes consistent with the module
    INPUT_DIM, HIDDEN, MIX, TARGETS = 16, 32, 4, 3

    # tiny batch: exercises the adaptive TB (no 256-row padding waste)
    _check(8, INPUT_DIM, HIDDEN, MIX, TARGETS, seed=0)
    # larger batch: exercises the multi-step batch grid / double-buffered DMA
    _check(1000, INPUT_DIM, HIDDEN, MIX, TARGETS, seed=1)

    print("KERNEL_OK")
</pallas_src>

<mosaic_0001>
module attributes {stable_mosaic.version = 11 : i64} {
  func.func @gmm_forward_kernel(%arg0: i32, %arg1: memref<8x16xbf16, #tpu.memory_space<vmem>>, %arg2: memref<16x128xbf16, #tpu.memory_space<vmem>>, %arg3: memref<1x128xf32, #tpu.memory_space<vmem>>, %arg4: memref<128x128xbf16, #tpu.memory_space<vmem>>, %arg5: memref<1x128xf32, #tpu.memory_space<vmem>>, %arg6: memref<128x128xbf16, #tpu.memory_space<vmem>>, %arg7: memref<1x128xf32, #tpu.memory_space<vmem>>, %arg8: memref<128x128xbf16, #tpu.memory_space<vmem>>, %arg9: memref<1x128xf32, #tpu.memory_space<vmem>>, %arg10: memref<8x128xf32, #tpu.memory_space<vmem>>) attributes {dimension_semantics = [#tpu.dimension_semantics<parallel>], iteration_bounds = array<i64: 1>, scalar_prefetch = 0 : i64, scratch_operands = 0 : i64, tpu.core_type = #tpu.core_type<tc>, window_params = [{transform_indices = @transform_0, window_bounds = array<i64: 8, 16>}, {pipeline_mode = #tpu.pipeline_mode<synchronous>, transform_indices = @transform_1, window_bounds = array<i64: 16, 128>}, {pipeline_mode = #tpu.pipeline_mode<synchronous>, transform_indices = @transform_2, window_bounds = array<i64: 1, 128>}, {pipeline_mode = #tpu.pipeline_mode<synchronous>, transform_indices = @transform_3, window_bounds = array<i64: 128, 128>}, {pipeline_mode = #tpu.pipeline_mode<synchronous>, transform_indices = @transform_4, window_bounds = array<i64: 1, 128>}, {pipeline_mode = #tpu.pipeline_mode<synchronous>, transform_indices = @transform_5, window_bounds = array<i64: 128, 128>}, {pipeline_mode = #tpu.pipeline_mode<synchronous>, transform_indices = @transform_6, window_bounds = array<i64: 1, 128>}, {pipeline_mode = #tpu.pipeline_mode<synchronous>, transform_indices = @transform_7, window_bounds = array<i64: 128, 128>}, {pipeline_mode = #tpu.pipeline_mode<synchronous>, transform_indices = @transform_8, window_bounds = array<i64: 1, 128>}, {transform_indices = @transform_9, window_bounds = array<i64: 8, 128>}]} {
    %c0 = arith.constant 0 : index
    %c0_0 = arith.constant 0 : index
    %0 = vector.load %arg1[%c0, %c0_0] : memref<8x16xbf16, #tpu.memory_space<vmem>>, vector<8x16xbf16>
    %c0_1 = arith.constant 0 : index
    %c0_2 = arith.constant 0 : index
    %1 = vector.load %arg2[%c0_1, %c0_2] : memref<16x128xbf16, #tpu.memory_space<vmem>>, vector<16x128xbf16>
    %cst = arith.constant dense<0.000000e+00> : vector<8x128xf32>
    %2 = tpu.matmul %0, %1, %cst {dimension_numbers = #tpu.dot_dimension_numbers<[1], [0], [0], [1], [0, 0, 1, 1], [], []>} : vector<8x16xbf16>, vector<16x128xbf16>, vector<8x128xf32> -> vector<8x128xf32>
    %c0_3 = arith.constant 0 : index
    %c0_4 = arith.constant 0 : index
    %3 = vector.load %arg3[%c0_3, %c0_4] : memref<1x128xf32, #tpu.memory_space<vmem>>, vector<1x128xf32>
    %4 = vector.broadcast %3 : vector<1x128xf32> to vector<8x128xf32>
    %5 = arith.addf %2, %4 : vector<8x128xf32>
    %6 = math.tanh %5 : vector<8x128xf32>
    %7 = arith.truncf %6 : vector<8x128xf32> to vector<8x128xbf16>
    %c0_5 = arith.constant 0 : index
    %c0_6 = arith.constant 0 : index
    %8 = vector.load %arg4[%c0_5, %c0_6] : memref<128x128xbf16, #tpu.memory_space<vmem>>, vector<128x128xbf16>
    %cst_7 = arith.constant dense<0.000000e+00> : vector<8x128xf32>
    %9 = tpu.matmul %7, %8, %cst_7 {dimension_numbers = #tpu.dot_dimension_numbers<[1], [0], [0], [1], [0, 0, 1, 1], [], []>} : vector<8x128xbf16>, vector<128x128xbf16>, vector<8x128xf32> -> vector<8x128xf32>
    %c0_8 = arith.constant 0 : index
    %c0_9 = arith.constant 0 : index
    %10 = vector.load %arg5[%c0_8, %c0_9] : memref<1x128xf32, #tpu.memory_space<vmem>>, vector<1x128xf32>
    %11 = vector.broadcast %10 : vector<1x128xf32> to vector<8x128xf32>
    %12 = arith.addf %9, %11 : vector<8x128xf32>
    %13 = math.tanh %12 : vector<8x128xf32>
    %14 = arith.truncf %13 : vector<8x128xf32> to vector<8x128xbf16>
    %c0_10 = arith.constant 0 : index
    %c0_11 = arith.constant 0 : index
    %15 = vector.load %arg6[%c0_10, %c0_11] : memref<128x128xbf16, #tpu.memory_space<vmem>>, vector<128x128xbf16>
    %cst_12 = arith.constant dense<0.000000e+00> : vector<8x128xf32>
    %16 = tpu.matmul %14, %15, %cst_12 {dimension_numbers = #tpu.dot_dimension_numbers<[1], [0], [0], [1], [0, 0, 1, 1], [], []>} : vector<8x128xbf16>, vector<128x128xbf16>, vector<8x128xf32> -> vector<8x128xf32>
    %c0_13 = arith.constant 0 : index
    %c0_14 = arith.constant 0 : index
    %17 = vector.load %arg7[%c0_13, %c0_14] : memref<1x128xf32, #tpu.memory_space<vmem>>, vector<1x128xf32>
    %18 = vector.broadcast %17 : vector<1x128xf32> to vector<8x128xf32>
    %19 = arith.addf %16, %18 : vector<8x128xf32>
    %20 = arith.truncf %19 : vector<8x128xf32> to vector<8x128xbf16>
    %c0_15 = arith.constant 0 : index
    %c0_16 = arith.constant 0 : index
    %21 = vector.load %arg8[%c0_15, %c0_16] : memref<128x128xbf16, #tpu.memory_space<vmem>>, vector<128x128xbf16>
    %cst_17 = arith.constant dense<0.000000e+00> : vector<8x128xf32>
    %22 = tpu.matmul %20, %21, %cst_17 {dimension_numbers = #tpu.dot_dimension_numbers<[1], [0], [0], [1], [0, 0, 1, 1], [], []>} : vector<8x128xbf16>, vector<128x128xbf16>, vector<8x128xf32> -> vector<8x128xf32>
    %c0_18 = arith.constant 0 : index
    %c0_19 = arith.constant 0 : index
    %23 = vector.load %arg9[%c0_18, %c0_19] : memref<1x128xf32, #tpu.memory_space<vmem>>, vector<1x128xf32>
    %24 = vector.broadcast %23 : vector<1x128xf32> to vector<8x128xf32>
    %25 = arith.addf %22, %24 : vector<8x128xf32>
    %26 = tpu.iota {dimensions = array<i32: 1>} : vector<1x128xi32>
    %c16_i32 = arith.constant 16 : i32
    %27 = vector.broadcast %c16_i32 : i32 to vector<1x128xi32>
    %28 = arith.cmpi sge, %26, %27 : vector<1x128xi32>
    %cst_20 = arith.constant -1.000000e+01 : f32
    %29 = vector.broadcast %cst_20 : f32 to vector<8x128xf32>
    %30 = arith.maximumf %25, %29 : vector<8x128xf32>
    %31 = vector.shape_cast %28 : vector<1x128xi1> to vector<1x128xi1>
    %32 = vector.broadcast %31 : vector<1x128xi1> to vector<8x128xi1>
    %33 = arith.select %32, %30, %25 : vector<8x128xi1>, vector<8x128xf32>
    %c0_21 = arith.constant 0 : index
    %c0_22 = arith.constant 0 : index
    %34 = vector.load %arg10[%c0_21, %c0_22] : memref<8x128xf32, #tpu.memory_space<vmem>>, vector<8x128xf32>
    tpu.vector_store %arg10[%c0_21, %c0_22], %33 {strides = array<i32>} : memref<8x128xf32, #tpu.memory_space<vmem>>, vector<8x128xf32>,
    return
  }
  func.func @transform_0(%arg0: i32) -> (i32, i32) {
    %c0_i32 = arith.constant 0 : i32
    %c0_i32_0 = arith.constant 0 : i32
    return %arg0, %c0_i32 : i32, i32
  }
  func.func @transform_1(%arg0: i32) -> (i32, i32) {
    %c0_i32 = arith.constant 0 : i32
    %c0_i32_0 = arith.constant 0 : i32
    %c0_i32_1 = arith.constant 0 : i32
    return %c0_i32, %c0_i32_0 : i32, i32
  }
  func.func @transform_2(%arg0: i32) -> (i32, i32) {
    %c0_i32 = arith.constant 0 : i32
    %c0_i32_0 = arith.constant 0 : i32
    %c0_i32_1 = arith.constant 0 : i32
    return %c0_i32, %c0_i32_0 : i32, i32
  }
  func.func @transform_3(%arg0: i32) -> (i32, i32) {
    %c0_i32 = arith.constant 0 : i32
    %c0_i32_0 = arith.constant 0 : i32
    %c0_i32_1 = arith.constant 0 : i32
    return %c0_i32, %c0_i32_0 : i32, i32
  }
  func.func @transform_4(%arg0: i32) -> (i32, i32) {
    %c0_i32 = arith.constant 0 : i32
    %c0_i32_0 = arith.constant 0 : i32
    %c0_i32_1 = arith.constant 0 : i32
    return %c0_i32, %c0_i32_0 : i32, i32
  }
  func.func @transform_5(%arg0: i32) -> (i32, i32) {
    %c0_i32 = arith.constant 0 : i32
    %c0_i32_0 = arith.constant 0 : i32
    %c0_i32_1 = arith.constant 0 : i32
    return %c0_i32, %c0_i32_0 : i32, i32
  }
  func.func @transform_6(%arg0: i32) -> (i32, i32) {
    %c0_i32 = arith.constant 0 : i32
    %c0_i32_0 = arith.constant 0 : i32
    %c0_i32_1 = arith.constant 0 : i32
    return %c0_i32, %c0_i32_0 : i32, i32
  }
  func.func @transform_7(%arg0: i32) -> (i32, i32) {
    %c0_i32 = arith.constant 0 : i32
    %c0_i32_0 = arith.constant 0 : i32
    %c0_i32_1 = arith.constant 0 : i32
    return %c0_i32, %c0_i32_0 : i32, i32
  }
  func.func @transform_8(%arg0: i32) -> (i32, i32) {
    %c0_i32 = arith.constant 0 : i32
    %c0_i32_0 = arith.constant 0 : i32
    %c0_i32_1 = arith.constant 0 : i32
    return %c0_i32, %c0_i32_0 : i32, i32
  }
  func.func @transform_9(%arg0: i32) -> (i32, i32) {
    %c0_i32 = arith.constant 0 : i32
    %c0_i32_0 = arith.constant 0 : i32
    return %arg0, %c0_i32 : i32, i32
  }
}

</mosaic_0001>

<llo_original>
// kernel: tpu_custom_call.1
$region0: #{tpu_custom_call.1}
  #allocation0 [shape = 'u32[]', space=smem, size = 0x4, offset = 0x4, fixed_abs, tag = 'smem constant byte address 0x4 - core index']
  #allocation1 [shape = 'u32[144,128]{1,0:T(1,128)}', space=vmem, size = 0x12000, scoped, tag = 'internal scratch']
  %s0 = inlined_call_operand.hbm [shape: bf16[8,16], index: 0, kind: input, shape index: {}]
  %s1 = inlined_call_operand.hbm [shape: bf16[16,128], index: 1, kind: input, shape index: {}]
  %s2 = inlined_call_operand.vmem [shape: f32[1,128], index: 2, kind: input, shape index: {}]
  %s3 = inlined_call_operand.hbm [shape: bf16[128,128], index: 3, kind: input, shape index: {}]
  %s4 = inlined_call_operand.vmem [shape: f32[1,128], index: 4, kind: input, shape index: {}]
  %s5 = inlined_call_operand.hbm [shape: bf16[128,128], index: 5, kind: input, shape index: {}]
  %s6 = inlined_call_operand.vmem [shape: f32[1,128], index: 6, kind: input, shape index: {}]
  %s7 = inlined_call_operand.hbm [shape: bf16[128,128], index: 7, kind: input, shape index: {}]
  %s8 = inlined_call_operand.vmem [shape: f32[1,128], index: 8, kind: input, shape index: {}]
  %s9 = inlined_call_operand.hbm [shape: f32[8,128], index: 9, kind: output, shape index: {}]
  %s10 = sld [smem:[#allocation0]]
  $region66: #{tpu_custom_call.1} parent=0
    _
  %s12 = ssub.s32 1, %s10
  %s13 = scalar_select 0, %s12, %s10
  $region1: #{tpu_custom_call.1} parent=0
    #allocation2 [shape = 'u8[2048]{0}', space=vmem, size = 0x800, scoped, tag = 'input window, operand 0, single buffered']
    #allocation3 [shape = 's32[1]{0}', space=sflag, size = 0x4, scoped, tag = 'scoped memory for tpu_custom_call.1']
    #allocation4 [shape = 's32[1]{0}', space=sflag, size = 0x4, scoped, tag = 'scoped memory for tpu_custom_call.1']
    #allocation5 [shape = 'u8[4096]{0}', space=vmem, size = 0x1000, scoped, tag = 'input window, operand 1, single buffered']
    #allocation6 [shape = 's32[1]{0}', space=sflag, size = 0x4, scoped, tag = 'scoped memory for tpu_custom_call.1']
    #allocation7 [shape = 'u8[32768]{0}', space=vmem, size = 0x8000, scoped, tag = 'input window, operand 3, single buffered']
    #allocation8 [shape = 'u8[32768]{0}', space=vmem, size = 0x8000, scoped, tag = 'input window, operand 5, single buffered']
    #allocation9 [shape = 's32[1]{0}', space=sflag, size = 0x4, scoped, tag = 'scoped memory for tpu_custom_call.1']
    #allocation10 [shape = 'u8[32768]{0}', space=vmem, size = 0x8000, scoped, tag = 'input window, operand 7, single buffered']
    #allocation11 [shape = 'u8[4096]{0}', space=vmem, size = 0x1000, scoped, tag = 'output window, operand 0, single buffered']
    %14 = vsyncpa [#allocation3], 0
    %15 = vsyncpa [#allocation6], 0
    %16 = vsyncpa [#allocation9], 0
    %17 = vsyncpa [#allocation4], 0
    // Predicated region
    $region2: #{tpu_custom_call.1} parent=1 // pred_check
      _
    $region3: #{tpu_custom_call.1} parent=1 // pred_check_branch
      %19 = sbr.rel (0) target = $region5
    $region4: #{tpu_custom_call.1} parent=1 // pred_region
      %s21 = ssub.s32 64, 64
      %22 = vsyncadd [#allocation3], %s21
      %s24 = sshll.u32 [#allocation2], 4
      %s25 = int_to_ptr.vmem [resolvable:$true] %s24
      %27 = dma.hbm_to_vmem [thread:$0]  %s0, 64, %s25, [#allocation3]
    $region5: #{tpu_custom_call.1} parent=1 // pred_fallthru
      _
    // Predicated region
    $region6: #{tpu_custom_call.1} parent=1 // pred_check
      _
    $region7: #{tpu_custom_call.1} parent=1 // pred_check_branch
      %29 = sbr.rel (0) target = $region9
    $region8: #{tpu_custom_call.1} parent=1 // pred_region
      %s31 = ssub.s32 128, 128
      %32 = vsyncadd [#allocation6], %s31
      %s33 = sshll.u32 [#allocation5], 4
      %s34 = int_to_ptr.vmem [resolvable:$true] %s33
      %39 = dma.hbm_to_vmem [thread:$0]  %s1, 128, %s34, [#allocation6], 64, 64, 4
    $region9: #{tpu_custom_call.1} parent=1 // pred_fallthru
      _
    // Predicated region
    $region10: #{tpu_custom_call.1} parent=1 // pred_check
      _
    $region11: #{tpu_custom_call.1} parent=1 // pred_check_branch
      %41 = sbr.rel (0) target = $region13
    $region12: #{tpu_custom_call.1} parent=1 // pred_region
      _
    $region13: #{tpu_custom_call.1} parent=1 // pred_fallthru
      _
    // Predicated region
    $region14: #{tpu_custom_call.1} parent=1 // pred_check
      _
    $region15: #{tpu_custom_call.1} parent=1 // pred_check_branch
      %43 = sbr.rel (0) target = $region17
    $region16: #{tpu_custom_call.1} parent=1 // pred_region
      %s45 = ssub.s32 1024, 1024
      %46 = vsyncadd [#allocation6], %s45
      %s47 = sshll.u32 [#allocation7], 4
      %s48 = int_to_ptr.vmem [resolvable:$true] %s47
      %53 = dma.hbm_to_vmem [thread:$0]  %s3, 1024, %s48, [#allocation6], 64, 64, 4
    $region17: #{tpu_custom_call.1} parent=1 // pred_fallthru
      _
    // Predicated region
    $region18: #{tpu_custom_call.1} parent=1 // pred_check
      _
    $region19: #{tpu_custom_call.1} parent=1 // pred_check_branch
      %55 = sbr.rel (0) target = $region21
    $region20: #{tpu_custom_call.1} parent=1 // pred_region
      _
    $region21: #{tpu_custom_call.1} parent=1 // pred_fallthru
      _
    // Predicated region
    $region22: #{tpu_custom_call.1} parent=1 // pred_check
      _
    $region23: #{tpu_custom_call.1} parent=1 // pred_check_branch
      %57 = sbr.rel (0) target = $region25
    $region24: #{tpu_custom_call.1} parent=1 // pred_region
      %s59 = ssub.s32 1024, 1024
      %60 = vsyncadd [#allocation9], %s59
      %s61 = sshll.u32 [#allocation8], 4
      %s62 = int_to_ptr.vmem [resolvable:$true] %s61
      %67 = dma.hbm_to_vmem [thread:$0]  %s5, 1024, %s62, [#allocation9], 64, 64, 4
    $region25: #{tpu_custom_call.1} parent=1 // pred_fallthru
      _
    // Predicated region
    $region26: #{tpu_custom_call.1} parent=1 // pred_check
      _
    $region27: #{tpu_custom_call.1} parent=1 // pred_check_branch
      %69 = sbr.rel (0) target = $region29
    $region28: #{tpu_custom_call.1} parent=1 // pred_region
      _
    $region29: #{tpu_custom_call.1} parent=1 // pred_fallthru
      _
    // Predicated region
    $region30: #{tpu_custom_call.1} parent=1 // pred_check
      _
    $region31: #{tpu_custom_call.1} parent=1 // pred_check_branch
      %71 = sbr.rel (0) target = $region33
    $region32: #{tpu_custom_call.1} parent=1 // pred_region
      %s73 = ssub.s32 1024, 1024
      %74 = vsyncadd [#allocation9], %s73
      %s75 = sshll.u32 [#allocation10], 4
      %s76 = int_to_ptr.vmem [resolvable:$true] %s75
      %81 = dma.hbm_to_vmem [thread:$0]  %s7, 1024, %s76, [#allocation9], 64, 64, 4
    $region33: #{tpu_custom_call.1} parent=1 // pred_fallthru
      _
    // Predicated region
    $region34: #{tpu_custom_call.1} parent=1 // pred_check
      _
    $region35: #{tpu_custom_call.1} parent=1 // pred_check_branch
      %83 = sbr.rel (0) target = $region37
    $region36: #{tpu_custom_call.1} parent=1 // pred_region
      _
    $region37: #{tpu_custom_call.1} parent=1 // pred_fallthru
      _
    // Predicated region
    $region38: #{tpu_custom_call.1} parent=1 // pred_check
      _
    $region39: #{tpu_custom_call.1} parent=1 // pred_check_branch
      %85 = sbr.rel (0) target = $region41
    $region40: #{tpu_custom_call.1} parent=1 // pred_region
      %86 = dma.done [#allocation3], 64
    $region41: #{tpu_custom_call.1} parent=1 // pred_fallthru
      _
    // Predicated region
    $region42: #{tpu_custom_call.1} parent=1 // pred_check
      _
    $region43: #{tpu_custom_call.1} parent=1 // pred_check_branch
      %88 = sbr.rel (0) target = $region45
    $region44: #{tpu_custom_call.1} parent=1 // pred_region
      %89 = dma.done [#allocation6], 128
    $region45: #{tpu_custom_call.1} parent=1 // pred_fallthru
      _
    // Predicated region
    $region46: #{tpu_custom_call.1} parent=1 // pred_check
      _
    $region47: #{tpu_custom_call.1} parent=1 // pred_check_branch
      %91 = sbr.rel (0) target = $region49
    $region48: #{tpu_custom_call.1} parent=1 // pred_region
      %92 = dma.done [#allocation6], 1024
    $region49: #{tpu_custom_call.1} parent=1 // pred_fallthru
      _
    // Predicated region
    $region50: #{tpu_custom_call.1} parent=1 // pred_check
      _
    $region51: #{tpu_custom_call.1} parent=1 // pred_check_branch
      %94 = sbr.rel (0) target = $region53
    $region52: #{tpu_custom_call.1} parent=1 // pred_region
      %95 = dma.done [#allocation9], 1024
    $region53: #{tpu_custom_call.1} parent=1 // pred_fallthru
      _
    // Predicated region
    $region54: #{tpu_custom_call.1} parent=1 // pred_check
      _
    $region55: #{tpu_custom_call.1} parent=1 // pred_check_branch
      %97 = sbr.rel (0) target = $region57
    $region56: #{tpu_custom_call.1} parent=1 // pred_region
      %98 = dma.done [#allocation9], 1024
    $region57: #{tpu_custom_call.1} parent=1 // pred_fallthru
      _
    %v100 = vld [vmem:[#allocation2] sm:$0xf]
    %v101 = vld [vmem:[#allocation5] sm:$0xf]
    %v102 = vld [vmem:[#allocation5 + $0x4] sm:$0xf]
    %v103 = vld [vmem:[%s2] sm:$0x1]
    %v105 = vlaneseq
    %v106 = vshrl.u32 %v105, 7
    %v107 = vsub.s32 0, %v106
    %v108 = vrot.slane %v103, %v107
    %v112 = vunpack.c.l.b16 %v101
    %v113 = vunpack.c.l.b16 %v102
    %v114 = vpack.c.b16 %v113, %v112
    %vm116 = vcmask 130048
    %v118 = vsel %vm116, %v100, 0
    %120 = vmatprep.subr.bf16.mxu0 0
    %121 = vmatpush1.bf16.msra.mxu0 %v114
    %122 = vmatprep.subr.bf16.mxu0 0
    %123 = vmatpush1.bf16.msra.mxu0 0
    %124 = vmatprep.subr.bf16.mxu0 0
    %125 = vmatpush1.bf16.msra.mxu0 0
    %126 = vmatprep.subr.bf16.mxu0 0
    %127 = vmatpush1.bf16.msra.mxu0 0
    %128 = vmatprep.subr.bf16.mxu0 0
    %129 = vmatpush1.bf16.msra.mxu0 0
    %130 = vmatprep.subr.bf16.mxu0 0
    %131 = vmatpush1.bf16.msra.mxu0 0
    %132 = vmatprep.subr.bf16.mxu0 0
    %133 = vmatpush1.bf16.msra.mxu0 0
    %134 = vmatprep.subr.bf16.mxu0 0
    %135 = vmatpush1.bf16.msra.mxu0 0
    %136 = vmatprep.subr.bf16.mxu0 0
    %137 = vmatpush1.bf16.msra.mxu0 0
    %138 = vmatprep.subr.bf16.mxu0 0
    %139 = vmatpush1.bf16.msra.mxu0 0
    %140 = vmatprep.subr.bf16.mxu0 0
    %141 = vmatpush1.bf16.msra.mxu0 0
    %142 = vmatprep.subr.bf16.mxu0 0
    %143 = vmatpush1.bf16.msra.mxu0 0
    %144 = vmatprep.subr.bf16.mxu0 0
    %145 = vmatpush1.bf16.msra.mxu0 0
    %146 = vmatprep.subr.bf16.mxu0 0
    %147 = vmatpush1.bf16.msra.mxu0 0
    %148 = vmatprep.subr.bf16.mxu0 0
    %149 = vmatpush1.bf16.msra.mxu0 0
    %150 = vmatprep.subr.bf16.mxu0 0
    %151 = vmatpush1.bf16.msra.mxu0 0
    %152 = vmatprep.mubr.bf16.mxu0 0
    %153 = vmatmul.mubr.bf16.gmra.mrb[0].mxu0 %v118
    %v154 = vpop.f32.mrb[0].mxu0
    %v155 = vadd.f32 %v108, %v154
    %v156 = vpop.f32.mrb[0].mxu0
    %v157 = vpop.f32.mrb[0].mxu0
    %v158 = vpop.f32.mrb[0].mxu0
    %159 = vdwg.mxu0
    %v160 = vtanh.pop %v155
    %v161 = vpack.c.bf16 %v160, %v160
    %v162 = vld [vmem:[#allocation7] sm:$0xf]
    %v163 = vld [vmem:[#allocation7 + $0x4] sm:$0xf]
    %v164 = vld [vmem:[#allocation7 + $0x8] sm:$0xf]
    %v165 = vld [vmem:[#allocation7 + $0xc] sm:$0xf]
    %v166 = vld [vmem:[#allocation7 + $0x10] sm:$0xf]
    %v167 = vld [vmem:[#allocation7 + $0x14] sm:$0xf]
    %v168 = vld [vmem:[#allocation7 + $0x18] sm:$0xf]
    %v169 = vld [vmem:[#allocation7 + $0x1c] sm:$0xf]
    %v170 = vld [vmem:[#allocation7 + $0x20] sm:$0xf]
    %v171 = vld [vmem:[#allocation7 + $0x24] sm:$0xf]
    %v172 = vld [vmem:[#allocation7 + $0x28] sm:$0xf]
    %v173 = vld [vmem:[#allocation7 + $0x2c] sm:$0xf]
    %v174 = vld [vmem:[#allocation7 + $0x30] sm:$0xf]
    %v175 = vld [vmem:[#allocation7 + $0x34] sm:$0xf]
    %v176 = vld [vmem:[#allocation7 + $0x38] sm:$0xf]
    %v177 = vld [vmem:[#allocation7 + $0x3c] sm:$0xf]
    %v178 = vld [vmem:[%s4] sm:$0x1]
    %v180 = vlaneseq
    %v181 = vshrl.u32 %v180, 7
    %v182 = vsub.s32 0, %v181
    %v183 = vrot.slane %v178, %v182
    %v201 = vunpack.c.l.b16 %v162
    %v202 = vunpack.c.l.b16 %v163
    %v203 = vunpack.c.l.b16 %v164
    %v204 = vunpack.c.l.b16 %v165
    %v205 = vunpack.c.l.b16 %v166
    %v206 = vunpack.c.l.b16 %v167
    %v207 = vunpack.c.l.b16 %v168
    %v208 = vunpack.c.l.b16 %v169
    %v209 = vunpack.c.l.b16 %v170
    %v210 = vunpack.c.l.b16 %v171
    %v211 = vunpack.c.l.b16 %v172
    %v212 = vunpack.c.l.b16 %v173
    %v213 = vunpack.c.l.b16 %v174
    %v214 = vunpack.c.l.b16 %v175
    %v215 = vunpack.c.l.b16 %v176
    %v216 = vunpack.c.l.b16 %v177
    %v217 = vpack.c.b16 %v202, %v201
    %v218 = vpack.c.b16 %v204, %v203
    %v219 = vpack.c.b16 %v206, %v205
    %v220 = vpack.c.b16 %v208, %v207
    %v221 = vpack.c.b16 %v210, %v209
    %v222 = vpack.c.b16 %v212, %v211
    %v223 = vpack.c.b16 %v214, %v213
    %v224 = vpack.c.b16 %v216, %v215
    %233 = vmatprep.subr.bf16.mxu0 0
    %234 = vmatpush1.bf16.msra.mxu0 %v217
    %235 = vmatprep.subr.bf16.mxu0 0
    %236 = vmatpush1.bf16.msra.mxu0 %v218
    %237 = vmatprep.subr.bf16.mxu0 0
    %238 = vmatpush1.bf16.msra.mxu0 %v219
    %239 = vmatprep.subr.bf16.mxu0 0
    %240 = vmatpush1.bf16.msra.mxu0 %v220
    %241 = vmatprep.subr.bf16.mxu0 0
    %242 = vmatpush1.bf16.msra.mxu0 %v221
    %243 = vmatprep.subr.bf16.mxu0 0
    %244 = vmatpush1.bf16.msra.mxu0 %v222
    %245 = vmatprep.subr.bf16.mxu0 0
    %246 = vmatpush1.bf16.msra.mxu0 %v223
    %247 = vmatprep.subr.bf16.mxu0 0
    %248 = vmatpush1.bf16.msra.mxu0 %v224
    %249 = vmatprep.subr.bf16.mxu0 0
    %250 = vmatpush1.bf16.msra.mxu0 0
    %251 = vmatprep.subr.bf16.mxu0 0
    %252 = vmatpush1.bf16.msra.mxu0 0
    %253 = vmatprep.subr.bf16.mxu0 0
    %254 = vmatpush1.bf16.msra.mxu0 0
    %255 = vmatprep.subr.bf16.mxu0 0
    %256 = vmatpush1.bf16.msra.mxu0 0
    %257 = vmatprep.subr.bf16.mxu0 0
    %258 = vmatpush1.bf16.msra.mxu0 0
    %259 = vmatprep.subr.bf16.mxu0 0
    %260 = vmatpush1.bf16.msra.mxu0 0
    %261 = vmatprep.subr.bf16.mxu0 0
    %262 = vmatpush1.bf16.msra.mxu0 0
    %263 = vmatprep.subr.bf16.mxu0 0
    %264 = vmatpush1.bf16.msra.mxu0 0
    %265 = vmatprep.mubr.bf16.mxu0 0
    %266 = vmatmul.mubr.bf16.gmra.mrb[0].mxu0 %v161
    %v267 = vpop.f32.mrb[0].mxu0
    %v268 = vadd.f32 %v183, %v267
    %v269 = vpop.f32.mrb[0].mxu0
    %v270 = vpop.f32.mrb[0].mxu0
    %v271 = vpop.f32.mrb[0].mxu0
    %272 = vdwg.mxu0
    %v273 = vtanh.pop %v268
    %v274 = vpack.c.bf16 %v273, %v273
    %v275 = vld [vmem:[#allocation8] sm:$0xf]
    %v276 = vld [vmem:[#allocation8 + $0x4] sm:$0xf]
    %v277 = vld [vmem:[#allocation8 + $0x8] sm:$0xf]
    %v278 = vld [vmem:[#allocation8 + $0xc] sm:$0xf]
    %v279 = vld [vmem:[#allocation8 + $0x10] sm:$0xf]
    %v280 = vld [vmem:[#allocation8 + $0x14] sm:$0xf]
    %v281 = vld [vmem:[#allocation8 + $0x18] sm:$0xf]
    %v282 = vld [vmem:[#allocation8 + $0x1c] sm:$0xf]
    %v283 = vld [vmem:[#allocation8 + $0x20] sm:$0xf]
    %v284 = vld [vmem:[#allocation8 + $0x24] sm:$0xf]
    %v285 = vld [vmem:[#allocation8 + $0x28] sm:$0xf]
    %v286 = vld [vmem:[#allocation8 + $0x2c] sm:$0xf]
    %v287 = vld [vmem:[#allocation8 + $0x30] sm:$0xf]
    %v288 = vld [vmem:[#allocation8 + $0x34] sm:$0xf]
    %v289 = vld [vmem:[#allocation8 + $0x38] sm:$0xf]
    %v290 = vld [vmem:[#allocation8 + $0x3c] sm:$0xf]
    %v291 = vld [vmem:[%s6] sm:$0x1]
    %v293 = vlaneseq
    %v294 = vshrl.u32 %v293, 7
    %v295 = vsub.s32 0, %v294
    %v296 = vrot.slane %v291, %v295
    %v314 = vunpack.c.l.b16 %v275
    %v315 = vunpack.c.l.b16 %v276
    %v316 = vunpack.c.l.b16 %v277
    %v317 = vunpack.c.l.b16 %v278
    %v318 = vunpack.c.l.b16 %v279
    %v319 = vunpack.c.l.b16 %v280
    %v320 = vunpack.c.l.b16 %v281
    %v321 = vunpack.c.l.b16 %v282
    %v322 = vunpack.c.l.b16 %v283
    %v323 = vunpack.c.l.b16 %v284
    %v324 = vunpack.c.l.b16 %v285
    %v325 = vunpack.c.l.b16 %v286
    %v326 = vunpack.c.l.b16 %v287
    %v327 = vunpack.c.l.b16 %v288
    %v328 = vunpack.c.l.b16 %v289
    %v329 = vunpack.c.l.b16 %v290
    %v330 = vpack.c.b16 %v315, %v314
    %v331 = vpack.c.b16 %v317, %v316
    %v332 = vpack.c.b16 %v319, %v318
    %v333 = vpack.c.b16 %v321, %v320
    %v334 = vpack.c.b16 %v323, %v322
    %v335 = vpack.c.b16 %v325, %v324
    %v336 = vpack.c.b16 %v327, %v326
    %v337 = vpack.c.b16 %v329, %v328
    %346 = vmatprep.subr.bf16.mxu0 0
    %347 = vmatpush1.bf16.msra.mxu0 %v330
    %348 = vmatprep.subr.bf16.mxu0 0
    %349 = vmatpush1.bf16.msra.mxu0 %v331
    %350 = vmatprep.subr.bf16.mxu0 0
    %351 = vmatpush1.bf16.msra.mxu0 %v332
    %352 = vmatprep.subr.bf16.mxu0 0
    %353 = vmatpush1.bf16.msra.mxu0 %v333
    %354 = vmatprep.subr.bf16.mxu0 0
    %355 = vmatpush1.bf16.msra.mxu0 %v334
    %356 = vmatprep.subr.bf16.mxu0 0
    %357 = vmatpush1.bf16.msra.mxu0 %v335
    %358 = vmatprep.subr.bf16.mxu0 0
    %359 = vmatpush1.bf16.msra.mxu0 %v336
    %360 = vmatprep.subr.bf16.mxu0 0
    %361 = vmatpush1.bf16.msra.mxu0 %v337
    %362 = vmatprep.subr.bf16.mxu0 0
    %363 = vmatpush1.bf16.msra.mxu0 0
    %364 = vmatprep.subr.bf16.mxu0 0
    %365 = vmatpush1.bf16.msra.mxu0 0
    %366 = vmatprep.subr.bf16.mxu0 0
    %367 = vmatpush1.bf16.msra.mxu0 0
    %368 = vmatprep.subr.bf16.mxu0 0
    %369 = vmatpush1.bf16.msra.mxu0 0
    %370 = vmatprep.subr.bf16.mxu0 0
    %371 = vmatpush1.bf16.msra.mxu0 0
    %372 = vmatprep.subr.bf16.mxu0 0
    %373 = vmatpush1.bf16.msra.mxu0 0
    %374 = vmatprep.subr.bf16.mxu0 0
    %375 = vmatpush1.bf16.msra.mxu0 0
    %376 = vmatprep.subr.bf16.mxu0 0
    %377 = vmatpush1.bf16.msra.mxu0 0
    %378 = vmatprep.mubr.bf16.mxu0 0
    %379 = vmatmul.mubr.bf16.gmra.mrb[0].mxu0 %v274
    %v380 = vpop.f32.mrb[0].mxu0
    %v381 = vadd.f32 %v296, %v380
    %v382 = vpop.f32.mrb[0].mxu0
    %v383 = vpop.f32.mrb[0].mxu0
    %v384 = vpop.f32.mrb[0].mxu0
    %385 = vdwg.mxu0
    %v386 = vpack.c.bf16 %v381, %v381
    %v387 = vld [vmem:[#allocation10] sm:$0xf]
    %v388 = vld [vmem:[#allocation10 + $0x4] sm:$0xf]
    %v389 = vld [vmem:[#allocation10 + $0x8] sm:$0xf]
    %v390 = vld [vmem:[#allocation10 + $0xc] sm:$0xf]
    %v391 = vld [vmem:[#allocation10 + $0x10] sm:$0xf]
    %v392 = vld [vmem:[#allocation10 + $0x14] sm:$0xf]
    %v393 = vld [vmem:[#allocation10 + $0x18] sm:$0xf]
    %v394 = vld [vmem:[#allocation10 + $0x1c] sm:$0xf]
    %v395 = vld [vmem:[#allocation10 + $0x20] sm:$0xf]
    %v396 = vld [vmem:[#allocation10 + $0x24] sm:$0xf]
    %v397 = vld [vmem:[#allocation10 + $0x28] sm:$0xf]
    %v398 = vld [vmem:[#allocation10 + $0x2c] sm:$0xf]
    %v399 = vld [vmem:[#allocation10 + $0x30] sm:$0xf]
    %v400 = vld [vmem:[#allocation10 + $0x34] sm:$0xf]
    %v401 = vld [vmem:[#allocation10 + $0x38] sm:$0xf]
    %v402 = vld [vmem:[#allocation10 + $0x3c] sm:$0xf]
    %v403 = vld [vmem:[%s8] sm:$0x1]
    %v405 = vlaneseq
    %v406 = vshrl.u32 %v405, 7
    %v407 = vsub.s32 0, %v406
    %v408 = vrot.slane %v403, %v407
    %v426 = vunpack.c.l.b16 %v387
    %v427 = vunpack.c.l.b16 %v388
    %v428 = vunpack.c.l.b16 %v389
    %v429 = vunpack.c.l.b16 %v390
    %v430 = vunpack.c.l.b16 %v391
    %v431 = vunpack.c.l.b16 %v392
    %v432 = vunpack.c.l.b16 %v393
    %v433 = vunpack.c.l.b16 %v394
    %v434 = vunpack.c.l.b16 %v395
    %v435 = vunpack.c.l.b16 %v396
    %v436 = vunpack.c.l.b16 %v397
    %v437 = vunpack.c.l.b16 %v398
    %v438 = vunpack.c.l.b16 %v399
    %v439 = vunpack.c.l.b16 %v400
    %v440 = vunpack.c.l.b16 %v401
    %v441 = vunpack.c.l.b16 %v402
    %v442 = vpack.c.b16 %v427, %v426
    %v443 = vpack.c.b16 %v429, %v428
    %v444 = vpack.c.b16 %v431, %v430
    %v445 = vpack.c.b16 %v433, %v432
    %v446 = vpack.c.b16 %v435, %v434
    %v447 = vpack.c.b16 %v437, %v436
    %v448 = vpack.c.b16 %v439, %v438
    %v449 = vpack.c.b16 %v441, %v440
    %458 = vmatprep.subr.bf16.mxu0 0
    %459 = vmatpush1.bf16.msra.mxu0 %v442
    %460 = vmatprep.subr.bf16.mxu0 0
    %461 = vmatpush1.bf16.msra.mxu0 %v443
    %462 = vmatprep.subr.bf16.mxu0 0
    %463 = vmatpush1.bf16.msra.mxu0 %v444
    %464 = vmatprep.subr.bf16.mxu0 0
    %465 = vmatpush1.bf16.msra.mxu0 %v445
    %466 = vmatprep.subr.bf16.mxu0 0
    %467 = vmatpush1.bf16.msra.mxu0 %v446
    %468 = vmatprep.subr.bf16.mxu0 0
    %469 = vmatpush1.bf16.msra.mxu0 %v447
    %470 = vmatprep.subr.bf16.mxu0 0
    %471 = vmatpush1.bf16.msra.mxu0 %v448
    %472 = vmatprep.subr.bf16.mxu0 0
    %473 = vmatpush1.bf16.msra.mxu0 %v449
    %474 = vmatprep.subr.bf16.mxu0 0
    %475 = vmatpush1.bf16.msra.mxu0 0
    %476 = vmatprep.subr.bf16.mxu0 0
    %477 = vmatpush1.bf16.msra.mxu0 0
    %478 = vmatprep.subr.bf16.mxu0 0
    %479 = vmatpush1.bf16.msra.mxu0 0
    %480 = vmatprep.subr.bf16.mxu0 0
    %481 = vmatpush1.bf16.msra.mxu0 0
    %482 = vmatprep.subr.bf16.mxu0 0
    %483 = vmatpush1.bf16.msra.mxu0 0
    %484 = vmatprep.subr.bf16.mxu0 0
    %485 = vmatpush1.bf16.msra.mxu0 0
    %486 = vmatprep.subr.bf16.mxu0 0
    %487 = vmatpush1.bf16.msra.mxu0 0
    %488 = vmatprep.subr.bf16.mxu0 0
    %489 = vmatpush1.bf16.msra.mxu0 0
    %490 = vmatprep.mubr.bf16.mxu0 0
    %491 = vmatmul.mubr.bf16.gmra.mrb[0].mxu0 %v386
    %v492 = vpop.f32.mrb[0].mxu0
    %v493 = vadd.f32 %v408, %v492
    %v494 = vpop.f32.mrb[0].mxu0
    %v495 = vpop.f32.mrb[0].mxu0
    %v496 = vpop.f32.mrb[0].mxu0
    %497 = vdwg.mxu0
    %v498 = vlaneseq
    %v499 = vand.u32 %v498, 127
    %vm500 = vcmp.ge.s32.totalorder %v499, 16
    %v501 = vmax.f32 %v493, -10.0
    %v502 = vsel %vm500, 1, 0
    %vm503 = vcmp.eq.s32.totalorder %v502, 1
    %v504 = vsel %vm503, %v501, %v493
    %505 = vst [vmem:[#allocation11] sm:$0xff] %v504
    // Predicated region
    $region58: #{tpu_custom_call.1} parent=1 // pred_check
      _
    $region59: #{tpu_custom_call.1} parent=1 // pred_check_branch
      %507 = sbr.rel (0) target = $region61
    $region60: #{tpu_custom_call.1} parent=1 // pred_region
      %s509 = ssub.s32 128, 128
      %510 = vsyncadd [#allocation4], %s509
      %s512 = sshll.u32 [#allocation11], 4
      %s513 = int_to_ptr.vmem [resolvable:$true] %s512
      %515 = dma.vmem_to_hbm [thread:$0]  %s513, 128, %s9, [#allocation4]
    $region61: #{tpu_custom_call.1} parent=1 // pred_fallthru
      _
    // Predicated region
    $region62: #{tpu_custom_call.1} parent=1 // pred_check
      _
    $region63: #{tpu_custom_call.1} parent=1 // pred_check_branch
      %517 = sbr.rel (0) target = $region65
    $region64: #{tpu_custom_call.1} parent=1 // pred_region
      %518 = dma.done [#allocation4], 128
    $region65: #{tpu_custom_call.1} parent=1 // pred_fallthru
      _
    %519 = vsyncpa [#allocation3], 1
    %520 = vsyncpa [#allocation6], 1
    %521 = vsyncpa [#allocation9], 1
    %522 = vsyncpa [#allocation4], 1

</llo_original>
